<compile_context>
chip_gen: v5e
topology: v5e:2x2
jax: 0.10.0
libtpu: 0.0.40
codegen_flags: <defaults>
</compile_context>

<pallas_src>
import functools

import jax
import jax.numpy as jnp
from jax import lax
from jax.experimental import pallas as pl
from jax.experimental.pallas import tpu as pltpu


def _round_up(x, m):
    return ((x + m - 1) // m) * m


def _pick_tp_and_vmem(P, C, H, W, feat_itemsize, budget_bytes=20 << 20):
    """Pick the largest power-of-two P-tile (>=128, <=2048) that fits a VMEM budget.

    The budget is conservative so the same choice is safe on v7x (64 MiB VMEM),
    v6e and v5e (128 MiB).
    """
    p128 = _round_up(max(P, 1), 128)
    # Bytes per output lane that scale with TP (f32 intermediates: sel_x/sel_y,
    # iotas, stage-1 result + weighted copy, double-buffered gx/gz/out tiles).
    per_lane = 4 * (2 * (W + H) + 2 * C * H + 2 * C + 8)
    # Resident feature slab (double-buffered by the pipeline).
    fixed = 2 * C * H * W * feat_itemsize
    tp = 128
    while tp * 2 <= min(p128, 2048) and fixed + per_lane * (tp * 2) <= budget_bytes:
        tp *= 2
    est = fixed + per_lane * tp
    return tp, est


def _resampler_kernel(calib_ref, gx_ref, gz_ref, feat_ref, out_ref,
                      *, C, H, W, near, far):
    b = pl.program_id(0)

    # 2x2 calib (rows/cols [0, 2] of the 3x3 intrinsics) for this batch, SMEM.
    k00 = calib_ref[b, 0]
    k01 = calib_ref[b, 1]
    k10 = calib_ref[b, 2]
    k11 = calib_ref[b, 3]

    gx = gx_ref[...]            # (1, TP) BEV x coordinates of this P-tile
    gz = gz_ref[...]            # (1, TP) BEV z coordinates of this P-tile
    TP = gx.shape[1]

    # cam = calib2x2 @ [x, z]^T
    cam0 = k00 * gx + k01 * gz
    cam1 = k10 * gx + k11 * gz          # camera depth

    # u = cam0 / cam1 via EUP reciprocal (+1 Newton-Raphson step for f32
    # accuracy) instead of a VPU divide.
    inv = pl.reciprocal(cam1, approx=True)
    inv = inv * (2.0 - cam1 * inv)
    u = cam0 * inv
    # Zero-depth guard: 0/0 would give NaN coords and poison the bilinear
    # weights; push such points far out of range -> zeros padding.
    u = jnp.where(u == u, u, 1e30)

    u = u * (2.0 / float(W)) - 1.0
    zc = (cam1 - near) * (2.0 / (far - near)) - 1.0
    u = jnp.clip(u, -1.1, 1.1)
    zc = jnp.clip(zc, -1.1, 1.1)

    # grid_sample un-normalization (align_corners=False).
    px = ((u + 1.0) * float(W) - 1.0) * 0.5    # indexes input W   (1, TP)
    py = ((zc + 1.0) * float(H) - 1.0) * 0.5   # indexes input H   (1, TP)

    x0 = jnp.floor(px)
    y0 = jnp.floor(py)
    wx1 = px - x0
    wx0 = 1.0 - wx1
    wy1 = py - y0
    wy0 = 1.0 - wy1
    x0i = x0.astype(jnp.int32)
    y0i = y0.astype(jnp.int32)

    # Separable one-hot bilinear selection matrices.  Out-of-range corner
    # indices match no iota row -> grid_sample padding_mode='zeros'.
    iw = lax.broadcasted_iota(jnp.int32, (W, TP), 0)
    ih = lax.broadcasted_iota(jnp.int32, (H, TP), 0)
    sel_x = (jnp.where(iw == x0i, wx0, 0.0) +
             jnp.where(iw == x0i + 1, wx1, 0.0))        # (W, TP)
    sel_y = (jnp.where(ih == y0i, wy0, 0.0) +
             jnp.where(ih == y0i + 1, wy1, 0.0))        # (H, TP)

    # Stage 1 (MXU): interpolate along W for every (channel, image row).
    feat = feat_ref[0]                                   # (C*H, W), bf16
    s1 = jnp.dot(feat, sel_x.astype(feat.dtype),
                 preferred_element_type=jnp.float32)     # (C*H, TP) f32

    # Stage 2 (VPU): weighted reduce over H with sel_y.
    out = jnp.sum(s1.reshape(C, H, TP) * sel_y[None, :, :], axis=1)  # (C, TP)
    out_ref[...] = out[None].astype(out_ref.dtype)


def resampler_forward(features, calib, *, resolution, extents,
                      use_bf16_matmul=True):
    """JAX/Pallas equivalent of Resampler.forward.

    features: (B, C, H, W), calib: (B, 3, 3).  Returns (B, C, Z, X).
    """
    B, C, H, W = features.shape
    x1, z1, x2, z2 = extents
    near, far = float(z1), float(z2)

    # _make_grid: meshgrid(arange(z1,z2,res), arange(x1,x2,res)), 'ij' indexing.
    zs = jnp.arange(z1, z2, resolution, dtype=jnp.float32)
    xs = jnp.arange(x1, x2, resolution, dtype=jnp.float32)
    zz, xx = jnp.meshgrid(zs, xs, indexing="ij")      # (Z, X) each
    Z, X = zz.shape
    P = Z * X

    feat_dtype = jnp.bfloat16 if use_bf16_matmul else features.dtype
    feat = features.reshape(B, C * H, W).astype(feat_dtype)

    TP, est_bytes = _pick_tp_and_vmem(P, C, H, W, jnp.dtype(feat_dtype).itemsize)
    P_pad = _round_up(P, TP)
    num_p = P_pad // TP

    gx = xx.reshape(1, P)
    gz = zz.reshape(1, P)
    if P_pad != P:
        gx = jnp.pad(gx, ((0, 0), (0, P_pad - P)), mode="edge")
        gz = jnp.pad(gz, ((0, 0), (0, P_pad - P)), mode="edge")

    # calib[:, [0,2]][..., [0,2]] -> (B, 2, 2), flattened to (B, 4) prefetch.
    calib2 = calib[:, (0, 2), :][:, :, (0, 2)].reshape(B, 4).astype(jnp.float32)

    kernel = functools.partial(_resampler_kernel, C=C, H=H, W=W,
                               near=near, far=far)

    grid_spec = pltpu.PrefetchScalarGridSpec(
        num_scalar_prefetch=1,
        grid=(B, num_p),
        in_specs=[
            pl.BlockSpec((1, TP), lambda b, p, calib_ref: (0, p)),
            pl.BlockSpec((1, TP), lambda b, p, calib_ref: (0, p)),
            # Feature slab: index independent of p -> DMA'd once per batch,
            # stays VMEM-resident across P-tiles.
            pl.BlockSpec((1, C * H, W), lambda b, p, calib_ref: (b, 0, 0)),
        ],
        out_specs=pl.BlockSpec((1, C, TP), lambda b, p, calib_ref: (b, 0, p)),
    )

    # Only raise the scoped-VMEM limit when the working set actually needs it;
    # keep it below v7x's 64 MiB physical VMEM.
    vmem_limit = None
    if est_bytes > (12 << 20):
        vmem_limit = int(min(48 << 20, max(32 << 20, 2 * est_bytes)))

    out_flat = pl.pallas_call(
        kernel,
        grid_spec=grid_spec,
        out_shape=jax.ShapeDtypeStruct((B, C, P_pad), features.dtype),
        compiler_params=pltpu.CompilerParams(
            dimension_semantics=("parallel", "parallel"),
            vmem_limit_bytes=vmem_limit),
    )(calib2, gx, gz, feat)

    return out_flat[:, :, :P].reshape(B, C, Z, X)


# ---------------- pure-JAX reference (for a loose correctness check) ----------


def _grid_sample_bilinear_zeros(feat, grid):
    """F.grid_sample(feat, grid) bilinear / zeros padding / align_corners=False."""
    B, C, H, W = feat.shape
    u = grid[..., 0]
    v = grid[..., 1]
    px = ((u + 1.0) * W - 1.0) * 0.5
    py = ((v + 1.0) * H - 1.0) * 0.5
    x0 = jnp.floor(px).astype(jnp.int32)
    y0 = jnp.floor(py).astype(jnp.int32)
    wx1 = px - x0
    wx0 = 1.0 - wx1
    wy1 = py - y0
    wy0 = 1.0 - wy1

    bidx = jnp.arange(B)[:, None, None, None]
    cidx = jnp.arange(C)[None, :, None, None]

    def corner(xi, yi, w):
        valid = ((xi >= 0) & (xi < W) & (yi >= 0) & (yi < H)).astype(feat.dtype)
        xc = jnp.clip(xi, 0, W - 1)
        yc = jnp.clip(yi, 0, H - 1)
        vals = feat[bidx, cidx, yc[:, None], xc[:, None]]   # (B, C, Hg, Wg)
        return vals * (valid * w)[:, None]

    return (corner(x0, y0, wx0 * wy0) + corner(x0 + 1, y0, wx1 * wy0) +
            corner(x0, y0 + 1, wx0 * wy1) + corner(x0 + 1, y0 + 1, wx1 * wy1))


def resampler_reference(features, calib, *, resolution, extents):
    B, C, H, W = features.shape
    x1, z1, x2, z2 = extents
    near, far = float(z1), float(z2)
    zs = jnp.arange(z1, z2, resolution, dtype=jnp.float32)
    xs = jnp.arange(x1, x2, resolution, dtype=jnp.float32)
    zz, xx = jnp.meshgrid(zs, xs, indexing="ij")
    grid = jnp.stack([xx, zz], axis=-1)                       # (Z, X, 2)
    calib2 = calib[:, (0, 2), :][:, :, (0, 2)]                # (B, 2, 2)
    cam = jnp.einsum("bij,zxj->bzxi", calib2, grid)           # (B, Z, X, 2)
    u = cam[..., 0] / cam[..., 1]
    u = u / W * 2.0 - 1.0
    zc = (cam[..., 1] - near) / (far - near) * 2.0 - 1.0
    gcoords = jnp.clip(jnp.stack([u, zc], axis=-1), -1.1, 1.1)
    return _grid_sample_bilinear_zeros(features, gcoords)


if __name__ == "__main__":
    B, C, H, W = 2, 4, 16, 16
    resolution = 1.0
    extents = (-8.0, 1.0, 8.0, 9.0)   # -> Z = 8, X = 16 BEV output grid

    key = jax.random.PRNGKey(0)
    features = jax.random.normal(key, (B, C, H, W), dtype=jnp.float32)

    # Deterministic synthetic camera intrinsics (only rows/cols [0,2] matter).
    calib = jnp.stack([
        jnp.array([[6.0 + 2.0 * i, 0.0, 8.0 + 1.0 * i],
                   [0.0, 6.0 + 2.0 * i, 8.0],
                   [0.0, 0.0, 1.0]], dtype=jnp.float32)
        for i in range(B)
    ])

    out = resampler_forward(features, calib, resolution=resolution, extents=extents)
    jax.block_until_ready(out)
    assert out.shape == (B, C, 8, 16), out.shape

    ref = resampler_reference(features, calib, resolution=resolution, extents=extents)
    err = float(jnp.max(jnp.abs(out - ref)))
    assert err < 0.15, f"max abs error vs reference: {err}"
    print("KERNEL_OK")
</pallas_src>

<mosaic_0001>
module attributes {stable_mosaic.version = 11 : i64} {
  func.func @_resampler_kernel(%arg0: i32, %arg1: i32, %arg2: memref<2x4xf32, #tpu.memory_space<smem>>, %arg3: memref<1x128xf32, #tpu.memory_space<vmem>>, %arg4: memref<1x128xf32, #tpu.memory_space<vmem>>, %arg5: memref<1x64x16xbf16, #tpu.memory_space<vmem>>, %arg6: memref<1x4x128xf32, #tpu.memory_space<vmem>>) attributes {dimension_semantics = [#tpu.dimension_semantics<parallel>, #tpu.dimension_semantics<parallel>], iteration_bounds = array<i64: 2, 1>, scalar_prefetch = 1 : i64, scratch_operands = 0 : i64, tpu.core_type = #tpu.core_type<tc>, window_params = [{transform_indices = @transform_0, window_bounds = array<i64: 1, 128>}, {transform_indices = @transform_1, window_bounds = array<i64: 1, 128>}, {transform_indices = @transform_2, window_bounds = array<i64: 1, 64, 16>}, {transform_indices = @transform_3, window_bounds = array<i64: 1, 4, 128>}]} {
    %0 = arith.index_cast %arg0 : i32 to index
    %c0 = arith.constant 0 : index
    %1 = memref.load %arg2[%0, %c0] : memref<2x4xf32, #tpu.memory_space<smem>>
    %2 = arith.index_cast %arg0 : i32 to index
    %c1 = arith.constant 1 : index
    %3 = memref.load %arg2[%2, %c1] : memref<2x4xf32, #tpu.memory_space<smem>>
    %4 = arith.index_cast %arg0 : i32 to index
    %c2 = arith.constant 2 : index
    %5 = memref.load %arg2[%4, %c2] : memref<2x4xf32, #tpu.memory_space<smem>>
    %6 = arith.index_cast %arg0 : i32 to index
    %c3 = arith.constant 3 : index
    %7 = memref.load %arg2[%6, %c3] : memref<2x4xf32, #tpu.memory_space<smem>>
    %c0_0 = arith.constant 0 : index
    %c0_1 = arith.constant 0 : index
    %8 = vector.load %arg3[%c0_0, %c0_1] : memref<1x128xf32, #tpu.memory_space<vmem>>, vector<1x128xf32>
    %c0_2 = arith.constant 0 : index
    %c0_3 = arith.constant 0 : index
    %9 = vector.load %arg4[%c0_2, %c0_3] : memref<1x128xf32, #tpu.memory_space<vmem>>, vector<1x128xf32>
    %10 = vector.broadcast %1 : f32 to vector<1x128xf32>
    %11 = arith.mulf %10, %8 : vector<1x128xf32>
    %12 = vector.broadcast %3 : f32 to vector<1x128xf32>
    %13 = arith.mulf %12, %9 : vector<1x128xf32>
    %14 = arith.addf %11, %13 : vector<1x128xf32>
    %15 = vector.broadcast %5 : f32 to vector<1x128xf32>
    %16 = arith.mulf %15, %8 : vector<1x128xf32>
    %17 = vector.broadcast %7 : f32 to vector<1x128xf32>
    %18 = arith.mulf %17, %9 : vector<1x128xf32>
    %19 = arith.addf %16, %18 : vector<1x128xf32>
    %20 = tpu.reciprocal %19 {approx = true} : vector<1x128xf32> -> vector<1x128xf32>
    %21 = arith.mulf %19, %20 : vector<1x128xf32>
    %cst = arith.constant 2.000000e+00 : f32
    %22 = vector.broadcast %cst : f32 to vector<1x128xf32>
    %23 = arith.subf %22, %21 : vector<1x128xf32>
    %24 = arith.mulf %20, %23 : vector<1x128xf32>
    %25 = arith.mulf %14, %24 : vector<1x128xf32>
    %26 = arith.cmpf oeq, %25, %25 : vector<1x128xf32>
    %cst_4 = arith.constant 1.000000e+30 : f32
    %27 = vector.broadcast %cst_4 : f32 to vector<1x128xf32>
    %28 = arith.select %26, %25, %27 : vector<1x128xi1>, vector<1x128xf32>
    %cst_5 = arith.constant 1.250000e-01 : f32
    %29 = vector.broadcast %cst_5 : f32 to vector<1x128xf32>
    %30 = arith.mulf %28, %29 : vector<1x128xf32>
    %cst_6 = arith.constant 1.000000e+00 : f32
    %31 = vector.broadcast %cst_6 : f32 to vector<1x128xf32>
    %32 = arith.subf %30, %31 : vector<1x128xf32>
    %cst_7 = arith.constant 1.000000e+00 : f32
    %33 = vector.broadcast %cst_7 : f32 to vector<1x128xf32>
    %34 = arith.subf %19, %33 : vector<1x128xf32>
    %cst_8 = arith.constant 2.500000e-01 : f32
    %35 = vector.broadcast %cst_8 : f32 to vector<1x128xf32>
    %36 = arith.mulf %34, %35 : vector<1x128xf32>
    %cst_9 = arith.constant 1.000000e+00 : f32
    %37 = vector.broadcast %cst_9 : f32 to vector<1x128xf32>
    %38 = arith.subf %36, %37 : vector<1x128xf32>
    %cst_10 = arith.constant -1.100000e+00 : f32
    %cst_11 = arith.constant 1.100000e+00 : f32
    %39 = vector.broadcast %cst_10 : f32 to vector<1x128xf32>
    %40 = arith.maximumf %39, %32 : vector<1x128xf32>
    %41 = vector.broadcast %cst_11 : f32 to vector<1x128xf32>
    %42 = arith.minimumf %41, %40 : vector<1x128xf32>
    %cst_12 = arith.constant -1.100000e+00 : f32
    %cst_13 = arith.constant 1.100000e+00 : f32
    %43 = vector.broadcast %cst_12 : f32 to vector<1x128xf32>
    %44 = arith.maximumf %43, %38 : vector<1x128xf32>
    %45 = vector.broadcast %cst_13 : f32 to vector<1x128xf32>
    %46 = arith.minimumf %45, %44 : vector<1x128xf32>
    %cst_14 = arith.constant 1.000000e+00 : f32
    %47 = vector.broadcast %cst_14 : f32 to vector<1x128xf32>
    %48 = arith.addf %42, %47 : vector<1x128xf32>
    %cst_15 = arith.constant 1.600000e+01 : f32
    %49 = vector.broadcast %cst_15 : f32 to vector<1x128xf32>
    %50 = arith.mulf %48, %49 : vector<1x128xf32>
    %cst_16 = arith.constant 1.000000e+00 : f32
    %51 = vector.broadcast %cst_16 : f32 to vector<1x128xf32>
    %52 = arith.subf %50, %51 : vector<1x128xf32>
    %cst_17 = arith.constant 5.000000e-01 : f32
    %53 = vector.broadcast %cst_17 : f32 to vector<1x128xf32>
    %54 = arith.mulf %52, %53 : vector<1x128xf32>
    %cst_18 = arith.constant 1.000000e+00 : f32
    %55 = vector.broadcast %cst_18 : f32 to vector<1x128xf32>
    %56 = arith.addf %46, %55 : vector<1x128xf32>
    %cst_19 = arith.constant 1.600000e+01 : f32
    %57 = vector.broadcast %cst_19 : f32 to vector<1x128xf32>
    %58 = arith.mulf %56, %57 : vector<1x128xf32>
    %cst_20 = arith.constant 1.000000e+00 : f32
    %59 = vector.broadcast %cst_20 : f32 to vector<1x128xf32>
    %60 = arith.subf %58, %59 : vector<1x128xf32>
    %cst_21 = arith.constant 5.000000e-01 : f32
    %61 = vector.broadcast %cst_21 : f32 to vector<1x128xf32>
    %62 = arith.mulf %60, %61 : vector<1x128xf32>
    %63 = math.floor %54 : vector<1x128xf32>
    %64 = math.floor %62 : vector<1x128xf32>
    %65 = arith.subf %54, %63 : vector<1x128xf32>
    %cst_22 = arith.constant 1.000000e+00 : f32
    %66 = vector.broadcast %cst_22 : f32 to vector<1x128xf32>
    %67 = arith.subf %66, %65 : vector<1x128xf32>
    %68 = arith.subf %62, %64 : vector<1x128xf32>
    %cst_23 = arith.constant 1.000000e+00 : f32
    %69 = vector.broadcast %cst_23 : f32 to vector<1x128xf32>
    %70 = arith.subf %69, %68 : vector<1x128xf32>
    %71 = arith.fptosi %63 : vector<1x128xf32> to vector<1x128xi32>
    %72 = arith.fptosi %64 : vector<1x128xf32> to vector<1x128xi32>
    %73 = tpu.iota {dimensions = array<i32: 0>} : vector<16x128xi32>
    %74 = tpu.iota {dimensions = array<i32: 0>} : vector<16x128xi32>
    %75 = vector.broadcast %71 : vector<1x128xi32> to vector<16x128xi32>
    %76 = arith.cmpi eq, %73, %75 : vector<16x128xi32>
    %cst_24 = arith.constant 0.000000e+00 : f32
    %77 = vector.shape_cast %67 : vector<1x128xf32> to vector<1x128xf32>
    %78 = vector.broadcast %77 : vector<1x128xf32> to vector<16x128xf32>
    %79 = vector.broadcast %cst_24 : f32 to vector<16x128xf32>
    %80 = arith.select %76, %78, %79 : vector<16x128xi1>, vector<16x128xf32>
    %c1_i32 = arith.constant 1 : i32
    %81 = vector.broadcast %c1_i32 : i32 to vector<1x128xi32>
    %82 = arith.addi %71, %81 : vector<1x128xi32>
    %83 = vector.broadcast %82 : vector<1x128xi32> to vector<16x128xi32>
    %84 = arith.cmpi eq, %73, %83 : vector<16x128xi32>
    %cst_25 = arith.constant 0.000000e+00 : f32
    %85 = vector.shape_cast %65 : vector<1x128xf32> to vector<1x128xf32>
    %86 = vector.broadcast %85 : vector<1x128xf32> to vector<16x128xf32>
    %87 = vector.broadcast %cst_25 : f32 to vector<16x128xf32>
    %88 = arith.select %84, %86, %87 : vector<16x128xi1>, vector<16x128xf32>
    %89 = arith.addf %80, %88 : vector<16x128xf32>
    %90 = vector.broadcast %72 : vector<1x128xi32> to vector<16x128xi32>
    %91 = arith.cmpi eq, %74, %90 : vector<16x128xi32>
    %cst_26 = arith.constant 0.000000e+00 : f32
    %92 = vector.shape_cast %70 : vector<1x128xf32> to vector<1x128xf32>
    %93 = vector.broadcast %92 : vector<1x128xf32> to vector<16x128xf32>
    %94 = vector.broadcast %cst_26 : f32 to vector<16x128xf32>
    %95 = arith.select %91, %93, %94 : vector<16x128xi1>, vector<16x128xf32>
    %c1_i32_27 = arith.constant 1 : i32
    %96 = vector.broadcast %c1_i32_27 : i32 to vector<1x128xi32>
    %97 = arith.addi %72, %96 : vector<1x128xi32>
    %98 = vector.broadcast %97 : vector<1x128xi32> to vector<16x128xi32>
    %99 = arith.cmpi eq, %74, %98 : vector<16x128xi32>
    %cst_28 = arith.constant 0.000000e+00 : f32
    %100 = vector.shape_cast %68 : vector<1x128xf32> to vector<1x128xf32>
    %101 = vector.broadcast %100 : vector<1x128xf32> to vector<16x128xf32>
    %102 = vector.broadcast %cst_28 : f32 to vector<16x128xf32>
    %103 = arith.select %99, %101, %102 : vector<16x128xi1>, vector<16x128xf32>
    %104 = arith.addf %95, %103 : vector<16x128xf32>
    %c0_29 = arith.constant 0 : index
    %c0_30 = arith.constant 0 : index
    %c0_31 = arith.constant 0 : index
    %105 = vector.load %arg5[%c0_29, %c0_30, %c0_31] : memref<1x64x16xbf16, #tpu.memory_space<vmem>>, vector<1x64x16xbf16>
    %106 = vector.shape_cast %105 : vector<1x64x16xbf16> to vector<64x16xbf16>
    %107 = arith.truncf %89 : vector<16x128xf32> to vector<16x128xbf16>
    %cst_32 = arith.constant dense<0.000000e+00> : vector<64x128xf32>
    %108 = tpu.matmul %106, %107, %cst_32 {dimension_numbers = #tpu.dot_dimension_numbers<[1], [0], [0], [1], [0, 0, 1, 1], [], []>} : vector<64x16xbf16>, vector<16x128xbf16>, vector<64x128xf32> -> vector<64x128xf32>
    %109 = vector.shape_cast %108 : vector<64x128xf32> to vector<4x16x128xf32>
    %110 = vector.shape_cast %104 : vector<16x128xf32> to vector<1x16x128xf32>
    %111 = vector.broadcast %110 : vector<1x16x128xf32> to vector<4x16x128xf32>
    %112 = arith.mulf %109, %111 : vector<4x16x128xf32>
    %cst_33 = arith.constant dense<0.000000e+00> : vector<4x128xf32>
    %113 = vector.multi_reduction <add>, %112, %cst_33 [1] : vector<4x16x128xf32> to vector<4x128xf32>
    %114 = vector.shape_cast %113 : vector<4x128xf32> to vector<1x4x128xf32>
    %c0_34 = arith.constant 0 : index
    %c0_35 = arith.constant 0 : index
    %c0_36 = arith.constant 0 : index
    %115 = vector.load %arg6[%c0_34, %c0_35, %c0_36] : memref<1x4x128xf32, #tpu.memory_space<vmem>>, vector<1x4x128xf32>
    tpu.vector_store %arg6[%c0_34, %c0_35, %c0_36], %114 {strides = array<i32>} : memref<1x4x128xf32, #tpu.memory_space<vmem>>, vector<1x4x128xf32>,
    return
  }
  func.func @transform_0(%arg0: i32, %arg1: i32, %arg2: memref<2x4xf32, #tpu.memory_space<smem>>) -> (i32, i32) {
    %c0_i32 = arith.constant 0 : i32
    %c0_i32_0 = arith.constant 0 : i32
    return %c0_i32, %arg1 : i32, i32
  }
  func.func @transform_1(%arg0: i32, %arg1: i32, %arg2: memref<2x4xf32, #tpu.memory_space<smem>>) -> (i32, i32) {
    %c0_i32 = arith.constant 0 : i32
    %c0_i32_0 = arith.constant 0 : i32
    return %c0_i32, %arg1 : i32, i32
  }
  func.func @transform_2(%arg0: i32, %arg1: i32, %arg2: memref<2x4xf32, #tpu.memory_space<smem>>) -> (i32, i32, i32) {
    %c0_i32 = arith.constant 0 : i32
    %c0_i32_0 = arith.constant 0 : i32
    %c0_i32_1 = arith.constant 0 : i32
    return %arg0, %c0_i32, %c0_i32_0 : i32, i32, i32
  }
  func.func @transform_3(%arg0: i32, %arg1: i32, %arg2: memref<2x4xf32, #tpu.memory_space<smem>>) -> (i32, i32, i32) {
    %c0_i32 = arith.constant 0 : i32
    %c0_i32_0 = arith.constant 0 : i32
    return %arg0, %c0_i32, %arg1 : i32, i32, i32
  }
}

</mosaic_0001>

<llo_original>
// kernel: tpu_custom_call.1
$region0: #{tpu_custom_call.1}
  #allocation0 [shape = 'u32[]', space=smem, size = 0x4, offset = 0x4, fixed_abs, tag = 'smem constant byte address 0x4 - core index']
  #allocation1 [shape = 'u32[72,128]{1,0:T(1,128)}', space=vmem, size = 0x9000, scoped, tag = 'internal scratch']
  #allocation2 [shape = 's32[1]{0}', space=sflag, size = 0x4, scoped, tag = 'scoped memory for tpu_custom_call.1']
  #allocation3 [shape = 'u8[1024]{0}', space=smem, size = 0x400, scoped, tag = 'prefetched SMEM operand 0']
  %s0 = inlined_call_operand.vmem [shape: f32[2,4], index: 0, kind: input, shape index: {}]
  %s1 = inlined_call_operand.vmem [shape: f32[1,128], index: 1, kind: input, shape index: {}]
  %s2 = inlined_call_operand.vmem [shape: f32[1,128], index: 2, kind: input, shape index: {}]
  %s3 = inlined_call_operand.vmem [shape: bf16[2,64,16], index: 3, kind: input, shape index: {}]
  %s4 = inlined_call_operand.hbm [shape: f32[2,4,128], index: 4, kind: output, shape index: {}]
  %s5 = sld [smem:[#allocation0]]
  $region45: #{tpu_custom_call.1} parent=0
    _
  %s7 = ssub.s32 1, %s5
  %s8 = scalar_select 0, %s7, %s5
  %s10 = sshll.u32 %s0, 4
  %s11 = int_to_ptr.vmem [resolvable:$true] %s10
  %13 = dma.vmem_to_smem %s11, 32, [#allocation3], [#allocation2]
  %15 = dma.done [#allocation2], 32
  %16 = sfence
  $region1: #{tpu_custom_call.1} parent=0
    #allocation4 [shape = 'u8[4096]{0}', space=vmem, size = 0x1000, scoped, tag = 'output window, operand 0']
    #allocation5 [shape = 's32[2]{0}', space=sflag, size = 0x8, scoped, tag = 'scoped memory for tpu_custom_call.1']
    %17 = vsyncpa [#allocation5], 0
    %s18 = scalar_lea.sflag [#allocation5], 1
    %19 = vsyncpa %s18, 0
    loop: start=0, step=1, limit=4
    $region2: #{tpu_custom_call.1} parent=1 // loop_pre_header
      _
    $region3: #{tpu_custom_call.1} parent=1 // loop_header
      %s21 = sphi 0, %s25
      %p22 = scmp.ge.s32.totalorder %s21, 4
      %s28 = sphi 0, %s40
      %s29 = sphi 0, %s36
      %s30 = sphi 0, %s28
      %s31 = sphi 0, %s29
      %s32 = sphi 0, %s30
      %s33 = sphi 0, %s31
      %s43 = sphi 0, %s45
      %s46 = sphi 0, %s43
      %s47 = sphi 0, %s46
      %s63 = sphi 0, %s47
      %s69 = sphi 0, %s71
      %s72 = sphi 0, %s69
      %s73 = sphi 0, %s72
      %s89 = sphi 0, %s73
      %s95 = sphi 0, %s97
      %s98 = sphi 0, %s95
      %s99 = sphi 0, %s98
      %s115 = sphi 0, %s99
      %s123 = sphi 0, %s125
      %s126 = sphi 0, %s123
      %s127 = sphi 0, %s126
      %s143 = sphi 0, %s127
    $region4: #{tpu_custom_call.1} parent=1 // loop_header_branch
      %24 = sbr.rel (%p22) target = $region8
    $region5: #{tpu_custom_call.1} parent=1 // loop_body
      %s26 = ssub.s32 %s21, 1
      %s27 = ssub.s32 %s21, 2
      %s34 = sadd.s32 1, %s29
      %p35 = scmp.ge.s32.totalorder %s34, 1
      %s36 = scalar_select %p35, 0, %s34
      %s37 = sadd.s32 1, %s28
      %s38 = scalar_select %p35, %s37, %s28
      %p39 = scmp.ge.s32.totalorder %s38, 2
      %s40 = scalar_select %p39, 0, %s38
      %s41 = ssub.s32 %s29, %s36
      %p42 = scmp.eq.s32.totalorder %s41, 0
      %s44 = sadd.s32 %s43, 1
      %s45 = scalar_select %p42, %s43, %s44
      %p48 = pneg %p42
      %p49 = scmp.eq.s32.totalorder %s21, 1
      %p50 = por %p48, %p49
      %p51 = scmp.ne.s32.totalorder %s43, %s46
      %p52 = scmp.eq.s32.totalorder %s21, 0
      %p53 = por %p51, %p52
      %p54 = scmp.ne.s32.totalorder %s43, %s46
      %p55 = scmp.eq.s32.totalorder %s26, 1
      %p56 = por %p54, %p55
      %p57 = scmp.ne.s32.totalorder %s46, %s47
      %p58 = scmp.eq.s32.totalorder %s26, 0
      %p59 = por %p57, %p58
      %p60 = scmp.ne.s32.totalorder %s46, %s47
      %p61 = scmp.eq.s32.totalorder %s27, 1
      %p62 = por %p60, %p61
      %p64 = scmp.ne.s32.totalorder %s47, %s63
      %p65 = scmp.eq.s32.totalorder %s27, 0
      %p66 = por %p64, %p65
      %s67 = ssub.s32 %s29, %s36
      %p68 = scmp.eq.s32.totalorder %s67, 0
      %s70 = sadd.s32 %s69, 1
      %s71 = scalar_select %p68, %s69, %s70
      %p74 = pneg %p68
      %p75 = scmp.eq.s32.totalorder %s21, 1
      %p76 = por %p74, %p75
      %p77 = scmp.ne.s32.totalorder %s69, %s72
      %p78 = scmp.eq.s32.totalorder %s21, 0
      %p79 = por %p77, %p78
      %p80 = scmp.ne.s32.totalorder %s69, %s72
      %p81 = scmp.eq.s32.totalorder %s26, 1
      %p82 = por %p80, %p81
      %p83 = scmp.ne.s32.totalorder %s72, %s73
      %p84 = scmp.eq.s32.totalorder %s26, 0
      %p85 = por %p83, %p84
      %p86 = scmp.ne.s32.totalorder %s72, %s73
      %p87 = scmp.eq.s32.totalorder %s27, 1
      %p88 = por %p86, %p87
      %p90 = scmp.ne.s32.totalorder %s73, %s89
      %p91 = scmp.eq.s32.totalorder %s27, 0
      %p92 = por %p90, %p91
      %s93 = ssub.s32 %s28, %s40
      %p94 = scmp.eq.s32.totalorder %s93, 0
      %s96 = sadd.s32 %s95, 1
      %s97 = scalar_select %p94, %s95, %s96
      %p100 = pneg %p94
      %p101 = scmp.eq.s32.totalorder %s21, 1
      %p102 = por %p100, %p101
      %p103 = scmp.ne.s32.totalorder %s95, %s98
      %p104 = scmp.eq.s32.totalorder %s21, 0
      %p105 = por %p103, %p104
      %p106 = scmp.ne.s32.totalorder %s95, %s98
      %p107 = scmp.eq.s32.totalorder %s26, 1
      %p108 = por %p106, %p107
      %p109 = scmp.ne.s32.totalorder %s98, %s99
      %p110 = scmp.eq.s32.totalorder %s26, 0
      %p111 = por %p109, %p110
      %p112 = scmp.ne.s32.totalorder %s98, %s99
      %p113 = scmp.eq.s32.totalorder %s27, 1
      %p114 = por %p112, %p113
      %p116 = scmp.ne.s32.totalorder %s99, %s115
      %p117 = scmp.eq.s32.totalorder %s27, 0
      %p118 = por %p116, %p117
      %s119 = ssub.s32 %s28, %s40
      %s120 = ssub.s32 %s29, %s36
      %s121 = sor.u32 %s119, %s120
      %p122 = scmp.eq.s32.totalorder %s121, 0
      %s124 = sadd.s32 %s123, 1
      %s125 = scalar_select %p122, %s123, %s124
      %p128 = pneg %p122
      %p129 = scmp.eq.s32.totalorder %s21, 1
      %p130 = por %p128, %p129
      %p131 = scmp.ne.s32.totalorder %s123, %s126
      %p132 = scmp.eq.s32.totalorder %s21, 0
      %p133 = por %p131, %p132
      %p134 = scmp.ne.s32.totalorder %s123, %s126
      %p135 = scmp.eq.s32.totalorder %s26, 1
      %p136 = por %p134, %p135
      %p137 = scmp.ne.s32.totalorder %s126, %s127
      %p138 = scmp.eq.s32.totalorder %s26, 0
      %p139 = por %p137, %p138
      %p140 = scmp.ne.s32.totalorder %s126, %s127
      %p141 = scmp.eq.s32.totalorder %s27, 1
      %p142 = por %p140, %p141
      %p144 = scmp.ne.s32.totalorder %s127, %s143
      %p145 = scmp.eq.s32.totalorder %s27, 0
      %p146 = por %p144, %p145
      %p147 = scmp.le.s32.totalorder 1, %s21
      %p148 = scmp.lt.s32.totalorder %s21, 3
      %p149 = pnand %p147, %p148
      %p150 = pneg %p149
      // Predicated region
      $region9: #{tpu_custom_call.1} parent=5 // pred_check
        _
      $region10: #{tpu_custom_call.1} parent=5 // pred_check_branch
        %152 = sbr.rel (%p149) target = $region12
      $region11: #{tpu_custom_call.1} parent=5 // pred_region
        %s153 = ssub.s32 %s21, 1
        // Predicated region
        $region13: #{tpu_custom_call.1} parent=11 // pred_check
          %p154 = pneg %p59
        $region14: #{tpu_custom_call.1} parent=11 // pred_check_branch
          %156 = sbr.rel (%p154) target = $region16
        $region15: #{tpu_custom_call.1} parent=11 // pred_region
          %p157 = scmp.lt.s32.totalorder %s31, 0
          %s158 = scalar_select %p157, %s31, 0
          %s159 = scalar_lea.vmem %s1, %s158
        $region16: #{tpu_custom_call.1} parent=11 // pred_fallthru
          _
        // Predicated region
        $region17: #{tpu_custom_call.1} parent=11 // pred_check
          %p160 = pneg %p85
        $region18: #{tpu_custom_call.1} parent=11 // pred_check_branch
          %162 = sbr.rel (%p160) target = $region20
        $region19: #{tpu_custom_call.1} parent=11 // pred_region
          %p163 = scmp.lt.s32.totalorder %s31, 0
          %s164 = scalar_select %p163, %s31, 0
          %s165 = scalar_lea.vmem %s2, %s164
        $region20: #{tpu_custom_call.1} parent=11 // pred_fallthru
          _
      $region12: #{tpu_custom_call.1} parent=5 // pred_fallthru
        _
      %p166 = scmp.lt.s32.totalorder %s21, 2
      // Predicated region
      $region21: #{tpu_custom_call.1} parent=5 // pred_check
        %p167 = pneg %p166
      $region22: #{tpu_custom_call.1} parent=5 // pred_check_branch
        %169 = sbr.rel (%p167) target = $region24
      $region23: #{tpu_custom_call.1} parent=5 // pred_region
        // Predicated region
        $region25: #{tpu_custom_call.1} parent=23 // pred_check
          %p170 = pneg %p105
        $region26: #{tpu_custom_call.1} parent=23 // pred_check_branch
          %172 = sbr.rel (%p170) target = $region28
        $region27: #{tpu_custom_call.1} parent=23 // pred_region
          %p173 = scmp.lt.s32.totalorder %s28, 1
          %s174 = scalar_select %p173, %s28, 1
          %s175 = smul.addr %s174, 8
          %s176 = smul.addr %s175, 4
          %s177 = scalar_lea.vmem %s3, %s176
        $region28: #{tpu_custom_call.1} parent=23 // pred_fallthru
          _
      $region24: #{tpu_custom_call.1} parent=5 // pred_fallthru
        _
      %p178 = scmp.le.s32.totalorder 1, %s21
      %p179 = scmp.lt.s32.totalorder %s21, 3
      %p180 = pnand %p178, %p179
      %p181 = pneg %p180
      // Predicated region
      $region29: #{tpu_custom_call.1} parent=5 // pred_check
        _
      $region30: #{tpu_custom_call.1} parent=5 // pred_check_branch
        %183 = sbr.rel (%p180) target = $region32
      $region31: #{tpu_custom_call.1} parent=5 // pred_region
        %s184 = ssub.s32 %s21, 1
        %p185 = scmp.lt.s32.totalorder %s31, 0
        %s186 = scalar_select %p185, %s31, 0
        %s187 = scalar_lea.vmem %s1, %s186
        %p188 = pneg %p59
        %p189 = pneg %p56
        %p190 = scmp.lt.s32.totalorder %s31, 0
        %s191 = scalar_select %p190, %s31, 0
        %s192 = scalar_lea.vmem %s2, %s191
        %p193 = pneg %p85
        %p194 = pneg %p82
        %p195 = scmp.lt.s32.totalorder %s30, 1
        %s196 = scalar_select %p195, %s30, 1
        %s197 = smul.addr %s196, 8
        %s198 = smul.addr %s197, 4
        %s199 = scalar_lea.vmem %s3, %s198
        %p200 = pneg %p111
        %p201 = pneg %p108
        %p202 = pneg %p139
        %p203 = pneg %p136
        %s204 = sand.u32 %s126, 1
        %s205 = scalar_lea.sflag [#allocation5], %s204
        %s206 = sand.u32 %s126, 1
        %s207 = smul.addr %s206, 4
        %s208 = scalar_lea.vmem [#allocation4], %s207
        %p209 = scmp.lt.s32.totalorder %s31, 0
        %s210 = scalar_select %p209, %s31, 0
        %s211 = scalar_lea.vmem %s1, %s210
        %p212 = scmp.lt.s32.totalorder %s31, 0
        %s213 = scalar_select %p212, %s31, 0
        %s214 = scalar_lea.vmem %s2, %s213
        %p215 = scmp.lt.s32.totalorder %s30, 1
        %s216 = scalar_select %p215, %s30, 1
        %s217 = smul.addr %s216, 8
        %s218 = smul.addr %s217, 4
        %s219 = scalar_lea.vmem %s3, %s218
        %s221 = smul.u32 %s30, 128
        %s222 = sld [smem:[#allocation3 + %s221]]
        %s223 = sadd.s32 %s221, 1
        %s224 = sld [smem:[#allocation3 + %s223]]
        %s225 = sadd.s32 %s221, 2
        %s226 = sld [smem:[#allocation3 + %s225]]
        %s227 = sadd.s32 %s221, 3
        %s228 = sld [smem:[#allocation3 + %s227]]
        %v229 = vld [vmem:[%s211] sm:$0x1]
        %v230 = vld [vmem:[%s214] sm:$0x1]
        %v231 = vstv %s222
        %v232 = vmul.f32 %v231, %v229
        %v233 = vstv %s224
        %v234 = vmul.f32 %v233, %v230
        %v235 = vadd.f32 %v232, %v234
        %v236 = vstv %s226
        %v237 = vmul.f32 %v236, %v229
        %v238 = vstv %s228
        %v239 = vmul.f32 %v238, %v230
        %v240 = vadd.f32 %v237, %v239
        %v241 = vrcp.pop %v240
        %v242 = vmul.f32 %v240, %v241
        %v243 = vsub.f32 2.0, %v242
        %v244 = vmul.f32 %v241, %v243
        %v245 = vmul.f32 %v235, %v244
        %vm246 = vcmp.eq.f32.partialorder %v245, %v245
        %v247 = vsel %vm246, %v245, 1e+30
        %v248 = vmul.f32 %v247, 0.125
        %v249 = vsub.f32 %v248, 1.0
        %v250 = vsub.f32 %v240, 1.0
        %v251 = vmul.f32 %v250, 0.25
        %v252 = vsub.f32 %v251, 1.0
        %v253 = vmax.f32 %v249, -1.1
        %v254 = vmin.f32 %v253, 1.1
        %v255 = vmax.f32 %v252, -1.1
        %v256 = vmin.f32 %v255, 1.1
        %v257 = vadd.f32 %v254, 1.0
        %v258 = vmul.f32 %v257, 16.0
        %v259 = vsub.f32 %v258, 1.0
        %v260 = vmul.f32 %v259, 0.5
        %v261 = vadd.f32 %v256, 1.0
        %v262 = vmul.f32 %v261, 16.0
        %v263 = vsub.f32 %v262, 1.0
        %v264 = vmul.f32 %v263, 0.5
        %v265 = vfloor.f32 %v260
        %v266 = vfloor.f32 %v264
        %v267 = vsub.f32 %v260, %v265
        %v268 = vsub.f32 1.0, %v267
        %v269 = vsub.f32 %v264, %v266
        %v270 = vsub.f32 1.0, %v269
        %v271 = vcvt.f32.s32.to.zero.pseudo %v265
        %v272 = vcvt.f32.s32.to.zero.pseudo %v266
        %v273 = vlaneseq
        %v274 = vshrl.u32 %v273, 7
        %v275 = vadd.s32 %v274, 8
        %v276 = vperm.slane %v271, 0
        %vm277 = vcmp.eq.s32.totalorder %v274, %v276
        %vm278 = vcmp.eq.s32.totalorder %v275, %v276
        %v280 = vperm.slane %v268, 0
        %v282 = vsel %vm277, %v280, 0.0
        %v283 = vsel %vm278, %v280, 0.0
        %v284 = vadd.s32 %v271, 1
        %v285 = vperm.slane %v284, 0
        %vm286 = vcmp.eq.s32.totalorder %v274, %v285
        %vm287 = vcmp.eq.s32.totalorder %v275, %v285
        %v289 = vperm.slane %v267, 0
        %v291 = vsel %vm286, %v289, 0.0
        %v292 = vsel %vm287, %v289, 0.0
        %v293 = vadd.f32 %v282, %v291
        %v294 = vadd.f32 %v283, %v292
        %v295 = vperm.slane %v272, 0
        %vm296 = vcmp.eq.s32.totalorder %v274, %v295
        %vm297 = vcmp.eq.s32.totalorder %v275, %v295
        %v299 = vperm.slane %v270, 0
        %v301 = vsel %vm296, %v299, 0.0
        %v302 = vsel %vm297, %v299, 0.0
        %v303 = vadd.s32 %v272, 1
        %v304 = vperm.slane %v303, 0
        %vm305 = vcmp.eq.s32.totalorder %v274, %v304
        %vm306 = vcmp.eq.s32.totalorder %v275, %v304
        %v308 = vperm.slane %v269, 0
        %v310 = vsel %vm305, %v308, 0.0
        %v311 = vsel %vm306, %v308, 0.0
        %v312 = vadd.f32 %v301, %v310
        %v313 = vadd.f32 %v302, %v311
        %v314 = vld [vmem:[%s219] sm:$0xf]
        %v315 = vld [vmem:[%s219 + $0x4] sm:$0xf]
        %v316 = vld [vmem:[%s219 + $0x8] sm:$0xf]
        %v317 = vld [vmem:[%s219 + $0xc] sm:$0xf]
        %v318 = vld [vmem:[%s219 + $0x10] sm:$0xf]
        %v319 = vld [vmem:[%s219 + $0x14] sm:$0xf]
        %v320 = vld [vmem:[%s219 + $0x18] sm:$0xf]
        %v321 = vld [vmem:[%s219 + $0x1c] sm:$0xf]
        %v322 = vpack.c.bf16 %v294, %v293
        %v331 = vunpack.c.l.b16 %v314
        %v332 = vunpack.c.l.b16 %v315
        %v333 = vunpack.c.l.b16 %v316
        %v334 = vunpack.c.l.b16 %v317
        %v335 = vunpack.c.l.b16 %v318
        %v336 = vunpack.c.l.b16 %v319
        %v337 = vunpack.c.l.b16 %v320
        %v338 = vunpack.c.l.b16 %v321
        %v339 = vpack.c.b16 %v332, %v331
        %v340 = vpack.c.b16 %v334, %v333
        %v341 = vpack.c.b16 %v336, %v335
        %v342 = vpack.c.b16 %v338, %v337
        %vm343 = vcmask 130048
        %v345 = vsel %vm343, %v339, 0
        %v348 = vsel %vm343, %v340, 0
        %v351 = vsel %vm343, %v341, 0
        %v354 = vsel %vm343, %v342, 0
        %356 = vmatpush.bf16.msra.mxu0 0
        %357 = vmatpush.bf16.msra.mxu0 0
        %358 = vmatpush.bf16.msra.mxu0 0
        %359 = vmatpush.bf16.msra.mxu0 0
        %360 = vmatpush.bf16.msra.mxu0 0
        %361 = vmatpush.bf16.msra.mxu0 0
        %362 = vmatpush.bf16.msra.mxu0 0
        %363 = vmatpush.bf16.msra.mxu0 %v322
        %364 = vmatmul.bf16.gmra.mxu0 %v345
        %v365 = vpop.f32.mrf.mxu0
        %v366 = vadd.f32 0.0, %v365
        %v367 = vpop.f32.mrf.mxu0
        %v368 = vadd.f32 0.0, %v367
        %369 = vmatmul.bf16.gmra.mxu0 %v348
        %v370 = vpop.f32.mrf.mxu0
        %v371 = vadd.f32 0.0, %v370
        %v372 = vpop.f32.mrf.mxu0
        %v373 = vadd.f32 0.0, %v372
        %374 = vmatmul.bf16.gmra.mxu0 %v351
        %v375 = vpop.f32.mrf.mxu0
        %v376 = vadd.f32 0.0, %v375
        %v377 = vpop.f32.mrf.mxu0
        %v378 = vadd.f32 0.0, %v377
        %379 = vmatmul.bf16.gmra.mxu0 %v354
        %v380 = vpop.f32.mrf.mxu0
        %v381 = vadd.f32 0.0, %v380
        %v382 = vpop.f32.mrf.mxu0
        %v383 = vadd.f32 0.0, %v382
        %384 = vdwg.mxu0
        %v385 = vmul.f32 %v366, %v312
        %v386 = vmul.f32 %v368, %v313
        %v387 = vmul.f32 %v371, %v312
        %v388 = vmul.f32 %v373, %v313
        %v389 = vmul.f32 %v376, %v312
        %v390 = vmul.f32 %v378, %v313
        %v391 = vmul.f32 %v381, %v312
        %v392 = vmul.f32 %v383, %v313
        %v393 = vadd.f32 %v385, %v386
        %v394 = vrot.slane %v393, 4
        %v395 = vadd.f32 %v393, %v394
        %v396 = vrot.slane %v395, 2
        %v397 = vadd.f32 %v395, %v396
        %v398 = vrot.slane %v397, 1
        %v399 = vadd.f32 %v397, %v398
        %v400 = vadd.f32 %v387, %v388
        %v401 = vrot.slane %v400, 4
        %v402 = vadd.f32 %v400, %v401
        %v403 = vrot.slane %v402, 2
        %v404 = vadd.f32 %v402, %v403
        %v405 = vrot.slane %v404, 1
        %v406 = vadd.f32 %v404, %v405
        %v407 = vadd.f32 %v389, %v390
        %v408 = vrot.slane %v407, 4
        %v409 = vadd.f32 %v407, %v408
        %v410 = vrot.slane %v409, 2
        %v411 = vadd.f32 %v409, %v410
        %v412 = vrot.slane %v411, 1
        %v413 = vadd.f32 %v411, %v412
        %v414 = vadd.f32 %v391, %v392
        %v415 = vrot.slane %v414, 4
        %v416 = vadd.f32 %v414, %v415
        %v417 = vrot.slane %v416, 2
        %v418 = vadd.f32 %v416, %v417
        %v419 = vrot.slane %v418, 1
        %v420 = vadd.f32 %v418, %v419
        %vm425 = vcmask 1041409
        %v426 = vsel %vm425, %v406, %v399
        %vm427 = vcmask 1042434
        %v428 = vsel %vm427, %v413, %v426
        %vm429 = vcmask 1043459
        %v430 = vsel %vm429, %v420, %v428
        %432 = vst [vmem:[%s208] sm:$0xf] %v430
        %s433 = sand.u32 %s126, 1
        %s434 = scalar_lea.sflag [#allocation5], %s433
        %s435 = sand.u32 %s126, 1
        %s436 = smul.addr %s435, 4
        %s437 = scalar_lea.vmem [#allocation4], %s436
        // Predicated region
        $region33: #{tpu_custom_call.1} parent=31 // pred_check
          %p438 = pneg %p136
        $region34: #{tpu_custom_call.1} parent=31 // pred_check_branch
          %440 = sbr.rel (%p438) target = $region36
        $region35: #{tpu_custom_call.1} parent=31 // pred_region
          %442 = vsyncadd %s434, 0
          %s443 = sadd.s32 %s31, %s30
          %s444 = smul.addr %s443, 4
          %s445 = scalar_lea.hbm %s4, %s444
          %s447 = sshll.u32 %s437, 4
          %s448 = int_to_ptr.vmem [resolvable:$true] %s447
          %s449 = sshll.u32 %s445, 4
          %s450 = int_to_ptr.hbm [resolvable:$true] %s449
          %452 = dma.vmem_to_hbm [thread:$0]  %s448, 64, %s450, %s434
        $region36: #{tpu_custom_call.1} parent=31 // pred_fallthru
          _
      $region32: #{tpu_custom_call.1} parent=5 // pred_fallthru
        _
      %p453 = scmp.le.s32.totalorder 2, %s21
      // Predicated region
      $region37: #{tpu_custom_call.1} parent=5 // pred_check
        %p454 = pneg %p453
      $region38: #{tpu_custom_call.1} parent=5 // pred_check_branch
        %456 = sbr.rel (%p454) target = $region40
      $region39: #{tpu_custom_call.1} parent=5 // pred_region
        %s457 = ssub.s32 %s21, 2
        // Predicated region
        $region41: #{tpu_custom_call.1} parent=39 // pred_check
          %p458 = pneg %p142
        $region42: #{tpu_custom_call.1} parent=39 // pred_check_branch
          %460 = sbr.rel (%p458) target = $region44
        $region43: #{tpu_custom_call.1} parent=39 // pred_region
          %s461 = sand.u32 %s127, 1
          %s462 = scalar_lea.sflag [#allocation5], %s461
          %s463 = sand.u32 %s127, 1
          %s464 = smul.addr %s463, 4
          %s465 = scalar_lea.vmem [#allocation4], %s464
          %467 = dma.done %s462, 64
        $region44: #{tpu_custom_call.1} parent=39 // pred_fallthru
          _
      $region40: #{tpu_custom_call.1} parent=5 // pred_fallthru
        _
    $region6: #{tpu_custom_call.1} parent=1 // loop_footer
      %s25 = sadd.s32 1, %s21
    $region7: #{tpu_custom_call.1} parent=1 // loop_footer_branch
      %20 = sbr.rel target = $region3
    $region8: #{tpu_custom_call.1} parent=1 // loop_exit
      _
    %468 = vsyncpa [#allocation5], 1
    %s469 = scalar_lea.sflag [#allocation5], 1
    %470 = vsyncpa %s469, 1

</llo_original>
